<compile_context>
chip_gen: v6e
topology: v6e:2x2x1
jax: 0.10.0
libtpu: 0.0.40
codegen_flags: <defaults>
</compile_context>

<pallas_src>
import functools

import jax
import jax.numpy as jnp
from jax.experimental import pallas as pl
from jax.experimental.pallas import tpu as pltpu


# ------------------------- projection kernel (tiny, once per batch) -----------------
def _project_kernel(x_ref, wl_ref, wr_ref, bl_ref, br_ref, left_ref, right_ref):
  xa = x_ref[0].astype(jnp.float32)                                   # (N, Ds)
  left_ref[0] = (jnp.dot(xa, wl_ref[...], preferred_element_type=jnp.float32)
                 + bl_ref[...]).astype(left_ref.dtype)
  right_ref[0] = (jnp.dot(xa, wr_ref[...], preferred_element_type=jnp.float32)
                  + br_ref[...]).astype(right_ref.dtype)


def _project(x, w, b, dim_pairwise):
  B, N, Ds = x.shape
  Dp = dim_pairwise
  w_left, w_right = w[:, :Dp], w[:, Dp:]
  b_left, b_right = b[:Dp].reshape(1, Dp), b[Dp:].reshape(1, Dp)
  left, right = pl.pallas_call(
      _project_kernel,
      out_shape=(jax.ShapeDtypeStruct((B, N, Dp), jnp.float32),
                 jax.ShapeDtypeStruct((B, N, Dp), jnp.float32)),
      grid_spec=pltpu.PrefetchScalarGridSpec(
          num_scalar_prefetch=0,
          grid=(B,),
          in_specs=[
              pl.BlockSpec((1, N, Ds), lambda b: (b, 0, 0)),
              pl.BlockSpec((Ds, Dp), lambda b: (0, 0)),
              pl.BlockSpec((Ds, Dp), lambda b: (0, 0)),
              pl.BlockSpec((1, Dp), lambda b: (0, 0)),
              pl.BlockSpec((1, Dp), lambda b: (0, 0)),
          ],
          out_specs=[
              pl.BlockSpec((1, N, Dp), lambda b: (b, 0, 0)),
              pl.BlockSpec((1, N, Dp), lambda b: (b, 0, 0)),
          ],
      ),
      compiler_params=pltpu.CompilerParams(dimension_semantics=("parallel",)),
  )(x, w_left, w_right, b_left, b_right)
  return left, right


# --------------------------------- pair kernel ---------------------------------------
def _pairwise_kernel(left_ref, right_ref, mrow_ref, mcol_ref, *rest,
                     max_rel_dist, row_block):
  if max_rel_dist > 0:
    srow_ref, scol_ref, emb_ref, pair_ref, mask_ref = rest
  else:
    pair_ref, mask_ref = rest

  left = left_ref[0]                                                  # (tb, Dp) f32
  right = right_ref[0]                                                # (N, Dp)  f32
  n_keys, dp = right.shape

  if max_rel_dist > 0:
    si = srow_ref[...]                                                # (tb, 1) int32
    sj = scol_ref[...]                                                # (1, N)  int32
    rel = jnp.clip(si - sj, -max_rel_dist, max_rel_dist) + max_rel_dist   # (tb, N)
    vocab_pad = emb_ref.shape[0]
    # Embedding lookup as one-hot @ table on the MXU (no gather); one-hot values are
    # exactly representable in bf16, accumulation stays f32.
    rel_flat = rel.reshape(row_block * n_keys, 1)
    onehot = (rel_flat == jax.lax.broadcasted_iota(
        jnp.int32, (row_block * n_keys, vocab_pad), 1)).astype(jnp.bfloat16)
    rel_emb = jnp.dot(onehot, emb_ref[...],
                      preferred_element_type=jnp.float32)             # (tb*N, Dp) f32
    pair = (rel_emb.reshape(row_block, n_keys, dp)
            + left[:, None, :] + right[None, :, :])
  else:
    pair = left[:, None, :] + right[None, :, :]

  pair_ref[0] = pair.astype(pair_ref.dtype)
  mask_ref[0] = (mrow_ref[0] * mcol_ref[0]).astype(mask_ref.dtype)    # (tb,1)*(1,N)


# --------------------------------- wrapper -------------------------------------------
def pairwise_embedding_forward(x, x_mask, params, *, dim_pairwise,
                               max_rel_dist=0, seq_index=None,
                               row_block=8, out_dtype=jnp.bfloat16):
  B, N, Ds = x.shape
  Dp = dim_pairwise
  assert N % row_block == 0 and row_block % 8 == 0, \
      "row_block must divide N and be a multiple of 8"
  num_i = N // row_block

  # Linear projection once (tiny Pallas matmul); its HBM round trip is ~1/N of the output.
  left, right = _project(x, params["w_pair"], params["b_pair"], Dp)

  mask_row = x_mask.reshape(B, N, 1)
  mask_col = x_mask.reshape(B, 1, N)

  inputs = [left, right, mask_row, mask_col]
  in_specs = [
      pl.BlockSpec((1, row_block, Dp), lambda bi, ii: (bi, ii, 0)),   # left (row tile)
      pl.BlockSpec((1, N, Dp), lambda bi, ii: (bi, 0, 0)),            # right (full seq)
      pl.BlockSpec((1, row_block, 1), lambda bi, ii: (bi, ii, 0)),    # mask rows
      pl.BlockSpec((1, 1, N), lambda bi, ii: (bi, 0, 0)),             # mask cols
  ]

  vocab_pad = 0
  if max_rel_dist > 0:
    if seq_index is None:
      seq_index = jnp.arange(N, dtype=jnp.int32)
    seq_index = seq_index.astype(jnp.int32)
    vocab = 2 * max_rel_dist + 1
    vocab_pad = ((vocab + 127) // 128) * 128                          # lane-dense vocab
    emb_pad = jnp.zeros((vocab_pad, Dp), jnp.bfloat16)
    emb_pad = emb_pad.at[:vocab].set(params["pos_emb"].astype(jnp.bfloat16))
    inputs += [seq_index.reshape(N, 1), seq_index.reshape(1, N), emb_pad]
    in_specs += [
        pl.BlockSpec((row_block, 1), lambda bi, ii: (ii, 0)),         # seq_index rows
        pl.BlockSpec((1, N), lambda bi, ii: (0, 0)),                  # seq_index cols
        pl.BlockSpec((vocab_pad, Dp), lambda bi, ii: (0, 0)),         # padded emb (bf16)
    ]

  kern = functools.partial(_pairwise_kernel, max_rel_dist=max_rel_dist,
                           row_block=row_block)

  # Explicit VMEM budget: double-buffered outputs + inputs + in-kernel f32/bf16 temps.
  pair_bytes = jnp.dtype(out_dtype).itemsize
  mask_bytes = jnp.dtype(x_mask.dtype).itemsize
  est = (2 * row_block * N * (Dp * pair_bytes + mask_bytes)           # output blocks
         + 2 * (row_block * Dp + N * Dp) * 4                          # left tile + right
         + 2 * (row_block + N) * mask_bytes                           # mask row/col
         + row_block * N * 2 * Dp * 4)                                # pair + rel_emb temps
  if max_rel_dist > 0:
    est += 2 * ((row_block + N) * 4 + vocab_pad * Dp * 2)             # seq idx + emb table
    est += row_block * N * 6 * vocab_pad                              # one-hot / iota temps
  vmem_limit = int(min(100 * 1024 * 1024,
                       max(32 * 1024 * 1024, 1.5 * est + (4 << 20))))

  pair, pair_mask = pl.pallas_call(
      kern,
      out_shape=(jax.ShapeDtypeStruct((B, N, N, Dp), out_dtype),
                 jax.ShapeDtypeStruct((B, N, N), x_mask.dtype)),
      grid_spec=pltpu.PrefetchScalarGridSpec(
          num_scalar_prefetch=0,
          grid=(B, num_i),
          in_specs=in_specs,
          out_specs=[
              pl.BlockSpec((1, row_block, N, Dp), lambda bi, ii: (bi, ii, 0, 0)),
              pl.BlockSpec((1, row_block, N), lambda bi, ii: (bi, ii, 0)),
          ],
      ),
      compiler_params=pltpu.CompilerParams(
          dimension_semantics=("parallel", "parallel"),
          vmem_limit_bytes=vmem_limit),
  )(*inputs)
  return pair, pair_mask


# ----------------------------- plain-JAX reference -----------------------------------
def reference_forward(x, x_mask, params, *, dim_pairwise, max_rel_dist=0, seq_index=None):
  proj = x @ params["w_pair"] + params["b_pair"]
  left, right = proj[..., :dim_pairwise], proj[..., dim_pairwise:]
  pair = left[:, :, None, :] + right[:, None, :, :]
  mask = x_mask[:, :, None] * x_mask[:, None, :]
  if max_rel_dist > 0:
    n = x.shape[1]
    si = jnp.arange(n, dtype=jnp.int32) if seq_index is None else seq_index.astype(jnp.int32)
    rel = jnp.clip(si[:, None] - si[None, :], -max_rel_dist, max_rel_dist) + max_rel_dist
    pair = pair + params["pos_emb"][rel]
  return pair, mask


if __name__ == "__main__":
  B, N = 2, 16
  D_single, D_pairwise = 32, 128       # Dp multiple of 128 -> lane-dense output stores
  max_rel_dist = 8

  key = jax.random.PRNGKey(0)
  ks = jax.random.split(key, 5)

  x = jax.random.normal(ks[0], (B, N, D_single), jnp.float32)
  x_mask = (jax.random.uniform(ks[1], (B, N)) > 0.2).astype(jnp.float32)

  params = {
      "w_pair": jax.random.normal(ks[2], (D_single, 2 * D_pairwise), jnp.float32)
                / jnp.sqrt(D_single),
      "b_pair": 0.1 * jax.random.normal(ks[3], (2 * D_pairwise,), jnp.float32),
      "pos_emb": jax.random.normal(ks[4], (2 * max_rel_dist + 1, D_pairwise), jnp.float32),
  }

  # Case 1: rel-pos path, bf16 output (production configuration; relaxed tolerance).
  pair, pmask = pairwise_embedding_forward(
      x, x_mask, params, dim_pairwise=D_pairwise, max_rel_dist=max_rel_dist,
      row_block=8, out_dtype=jnp.bfloat16)
  pair = jax.block_until_ready(pair)
  pmask = jax.block_until_ready(pmask)
  ref_pair, ref_mask = reference_forward(
      x, x_mask, params, dim_pairwise=D_pairwise, max_rel_dist=max_rel_dist)
  assert pair.shape == (B, N, N, D_pairwise) and pmask.shape == (B, N, N)
  assert bool(jnp.allclose(pair.astype(jnp.float32), ref_pair, atol=5e-2, rtol=2e-2)), \
      "pair mismatch (rel-pos, bf16)"
  assert bool(jnp.allclose(pmask, ref_mask, atol=1e-6)), "mask mismatch (rel-pos)"

  # Case 2: no rel-pos path, f32 output (tight check of the fused add path).
  pair0, pmask0 = pairwise_embedding_forward(
      x, x_mask, params, dim_pairwise=D_pairwise, max_rel_dist=0,
      row_block=8, out_dtype=jnp.float32)
  pair0 = jax.block_until_ready(pair0)
  ref_pair0, ref_mask0 = reference_forward(
      x, x_mask, params, dim_pairwise=D_pairwise, max_rel_dist=0)
  assert bool(jnp.allclose(pair0, ref_pair0, atol=1e-4, rtol=1e-4)), \
      "pair mismatch (no rel-pos, f32)"
  assert bool(jnp.allclose(pmask0, ref_mask0, atol=1e-6)), "mask mismatch (no rel-pos)"

  print("KERNEL_OK")
</pallas_src>

<mosaic_0001>
module attributes {stable_mosaic.version = 11 : i64} {
  func.func @_project_kernel(%arg0: i32, %arg1: memref<1x16x32xf32, #tpu.memory_space<vmem>>, %arg2: memref<32x128xf32, #tpu.memory_space<vmem>>, %arg3: memref<32x128xf32, #tpu.memory_space<vmem>>, %arg4: memref<1x128xf32, #tpu.memory_space<vmem>>, %arg5: memref<1x128xf32, #tpu.memory_space<vmem>>, %arg6: memref<1x16x128xf32, #tpu.memory_space<vmem>>, %arg7: memref<1x16x128xf32, #tpu.memory_space<vmem>>) attributes {dimension_semantics = [#tpu.dimension_semantics<parallel>], iteration_bounds = array<i64: 2>, scalar_prefetch = 0 : i64, scratch_operands = 0 : i64, tpu.core_type = #tpu.core_type<tc>, window_params = [{transform_indices = @transform_0, window_bounds = array<i64: 1, 16, 32>}, {pipeline_mode = #tpu.pipeline_mode<synchronous>, transform_indices = @transform_1, window_bounds = array<i64: 32, 128>}, {pipeline_mode = #tpu.pipeline_mode<synchronous>, transform_indices = @transform_2, window_bounds = array<i64: 32, 128>}, {pipeline_mode = #tpu.pipeline_mode<synchronous>, transform_indices = @transform_3, window_bounds = array<i64: 1, 128>}, {pipeline_mode = #tpu.pipeline_mode<synchronous>, transform_indices = @transform_4, window_bounds = array<i64: 1, 128>}, {transform_indices = @transform_5, window_bounds = array<i64: 1, 16, 128>}, {transform_indices = @transform_6, window_bounds = array<i64: 1, 16, 128>}]} {
    %c0 = arith.constant 0 : index
    %c0_0 = arith.constant 0 : index
    %c0_1 = arith.constant 0 : index
    %0 = vector.load %arg1[%c0, %c0_0, %c0_1] : memref<1x16x32xf32, #tpu.memory_space<vmem>>, vector<1x16x32xf32>
    %1 = vector.shape_cast %0 : vector<1x16x32xf32> to vector<16x32xf32>
    %c0_2 = arith.constant 0 : index
    %c0_3 = arith.constant 0 : index
    %2 = vector.load %arg2[%c0_2, %c0_3] : memref<32x128xf32, #tpu.memory_space<vmem>>, vector<32x128xf32>
    %cst = arith.constant dense<0.000000e+00> : vector<16x128xf32>
    %3 = tpu.matmul %1, %2, %cst {dimension_numbers = #tpu.dot_dimension_numbers<[1], [0], [0], [1], [0, 0, 1, 1], [], []>} : vector<16x32xf32>, vector<32x128xf32>, vector<16x128xf32> -> vector<16x128xf32>
    %c0_4 = arith.constant 0 : index
    %c0_5 = arith.constant 0 : index
    %4 = vector.load %arg4[%c0_4, %c0_5] : memref<1x128xf32, #tpu.memory_space<vmem>>, vector<1x128xf32>
    %5 = vector.broadcast %4 : vector<1x128xf32> to vector<16x128xf32>
    %6 = arith.addf %3, %5 : vector<16x128xf32>
    %c0_6 = arith.constant 0 : index
    %c0_7 = arith.constant 0 : index
    %c0_8 = arith.constant 0 : index
    %7 = vector.load %arg6[%c0_6, %c0_7, %c0_8] : memref<1x16x128xf32, #tpu.memory_space<vmem>>, vector<1x16x128xf32>
    %8 = vector.shape_cast %7 : vector<1x16x128xf32> to vector<16x128xf32>
    %9 = vector.shape_cast %6 : vector<16x128xf32> to vector<1x16x128xf32>
    tpu.vector_store %arg6[%c0_6, %c0_7, %c0_8], %9 {strides = array<i32>} : memref<1x16x128xf32, #tpu.memory_space<vmem>>, vector<1x16x128xf32>,
    %c0_9 = arith.constant 0 : index
    %c0_10 = arith.constant 0 : index
    %10 = vector.load %arg3[%c0_9, %c0_10] : memref<32x128xf32, #tpu.memory_space<vmem>>, vector<32x128xf32>
    %cst_11 = arith.constant dense<0.000000e+00> : vector<16x128xf32>
    %11 = tpu.matmul %1, %10, %cst_11 {dimension_numbers = #tpu.dot_dimension_numbers<[1], [0], [0], [1], [0, 0, 1, 1], [], []>} : vector<16x32xf32>, vector<32x128xf32>, vector<16x128xf32> -> vector<16x128xf32>
    %c0_12 = arith.constant 0 : index
    %c0_13 = arith.constant 0 : index
    %12 = vector.load %arg5[%c0_12, %c0_13] : memref<1x128xf32, #tpu.memory_space<vmem>>, vector<1x128xf32>
    %13 = vector.broadcast %12 : vector<1x128xf32> to vector<16x128xf32>
    %14 = arith.addf %11, %13 : vector<16x128xf32>
    %c0_14 = arith.constant 0 : index
    %c0_15 = arith.constant 0 : index
    %c0_16 = arith.constant 0 : index
    %15 = vector.load %arg7[%c0_14, %c0_15, %c0_16] : memref<1x16x128xf32, #tpu.memory_space<vmem>>, vector<1x16x128xf32>
    %16 = vector.shape_cast %15 : vector<1x16x128xf32> to vector<16x128xf32>
    %17 = vector.shape_cast %14 : vector<16x128xf32> to vector<1x16x128xf32>
    tpu.vector_store %arg7[%c0_14, %c0_15, %c0_16], %17 {strides = array<i32>} : memref<1x16x128xf32, #tpu.memory_space<vmem>>, vector<1x16x128xf32>,
    return
  }
  func.func @transform_0(%arg0: i32) -> (i32, i32, i32) {
    %c0_i32 = arith.constant 0 : i32
    %c0_i32_0 = arith.constant 0 : i32
    %c0_i32_1 = arith.constant 0 : i32
    return %arg0, %c0_i32, %c0_i32_0 : i32, i32, i32
  }
  func.func @transform_1(%arg0: i32) -> (i32, i32) {
    %c0_i32 = arith.constant 0 : i32
    %c0_i32_0 = arith.constant 0 : i32
    %c0_i32_1 = arith.constant 0 : i32
    return %c0_i32, %c0_i32_0 : i32, i32
  }
  func.func @transform_2(%arg0: i32) -> (i32, i32) {
    %c0_i32 = arith.constant 0 : i32
    %c0_i32_0 = arith.constant 0 : i32
    %c0_i32_1 = arith.constant 0 : i32
    return %c0_i32, %c0_i32_0 : i32, i32
  }
  func.func @transform_3(%arg0: i32) -> (i32, i32) {
    %c0_i32 = arith.constant 0 : i32
    %c0_i32_0 = arith.constant 0 : i32
    %c0_i32_1 = arith.constant 0 : i32
    return %c0_i32, %c0_i32_0 : i32, i32
  }
  func.func @transform_4(%arg0: i32) -> (i32, i32) {
    %c0_i32 = arith.constant 0 : i32
    %c0_i32_0 = arith.constant 0 : i32
    %c0_i32_1 = arith.constant 0 : i32
    return %c0_i32, %c0_i32_0 : i32, i32
  }
  func.func @transform_5(%arg0: i32) -> (i32, i32, i32) {
    %c0_i32 = arith.constant 0 : i32
    %c0_i32_0 = arith.constant 0 : i32
    %c0_i32_1 = arith.constant 0 : i32
    return %arg0, %c0_i32, %c0_i32_0 : i32, i32, i32
  }
  func.func @transform_6(%arg0: i32) -> (i32, i32, i32) {
    %c0_i32 = arith.constant 0 : i32
    %c0_i32_0 = arith.constant 0 : i32
    %c0_i32_1 = arith.constant 0 : i32
    return %arg0, %c0_i32, %c0_i32_0 : i32, i32, i32
  }
}

</mosaic_0001>

<llo_original>
// kernel: tpu_custom_call.1
$region0: #{tpu_custom_call.1}
  #allocation0 [shape = 'u32[]', space=smem, size = 0x4, offset = 0x4, fixed_abs, tag = 'smem constant byte address 0x4 - core index']
  #allocation1 [shape = 'u32[144,128]{1,0:T(1,128)}', space=vmem, size = 0x12000, scoped, tag = 'internal scratch']
  %s0 = inlined_call_operand.hbm [shape: f32[2,16,32], index: 0, kind: input, shape index: {}]
  %s1 = inlined_call_operand.hbm [shape: f32[32,128], index: 1, kind: input, shape index: {}]
  %s2 = inlined_call_operand.hbm [shape: f32[32,128], index: 2, kind: input, shape index: {}]
  %s3 = inlined_call_operand.vmem [shape: f32[1,128], index: 3, kind: input, shape index: {}]
  %s4 = inlined_call_operand.vmem [shape: f32[1,128], index: 4, kind: input, shape index: {}]
  %s5 = inlined_call_operand.hbm [shape: f32[2,16,128], index: 5, kind: output, shape index: {0}]
  %s6 = inlined_call_operand.hbm [shape: f32[2,16,128], index: 6, kind: output, shape index: {1}]
  %7 = xla_tuple %s5, %s6
  %s8 = sld [smem:[#allocation0]]
  $region73: #{tpu_custom_call.1} parent=0
    _
  %s10 = ssub.s32 1, %s8
  %s11 = scalar_select 0, %s10, %s8
  $region1: #{tpu_custom_call.1} parent=0
    #allocation2 [shape = 'u8[16384]{0}', space=vmem, size = 0x4000, scoped, tag = 'input window, operand 0']
    #allocation3 [shape = 's32[2]{0}', space=sflag, size = 0x8, scoped, tag = 'scoped memory for tpu_custom_call.1']
    #allocation4 [shape = 's32[2]{0}', space=sflag, size = 0x8, scoped, tag = 'scoped memory for tpu_custom_call.1']
    #allocation5 [shape = 'u8[16384]{0}', space=vmem, size = 0x4000, scoped, tag = 'input window, operand 1, single buffered']
    #allocation6 [shape = 's32[1]{0}', space=sflag, size = 0x4, scoped, tag = 'scoped memory for tpu_custom_call.1']
    #allocation7 [shape = 'u8[16384]{0}', space=vmem, size = 0x4000, scoped, tag = 'input window, operand 2, single buffered']
    #allocation8 [shape = 'u8[16384]{0}', space=vmem, size = 0x4000, scoped, tag = 'output window, operand 0']
    #allocation9 [shape = 'u8[16384]{0}', space=vmem, size = 0x4000, scoped, tag = 'output window, operand 1']
    #allocation10 [shape = 's32[2]{0}', space=sflag, size = 0x8, scoped, tag = 'scoped memory for tpu_custom_call.1']
    %12 = vsyncpa [#allocation3], 0
    %s13 = scalar_lea.sflag [#allocation3], 1
    %14 = vsyncpa %s13, 0
    %15 = vsyncpa [#allocation6], 0
    %16 = vsyncpa [#allocation4], 0
    %s17 = scalar_lea.sflag [#allocation4], 1
    %18 = vsyncpa %s17, 0
    %19 = vsyncpa [#allocation10], 0
    %s20 = scalar_lea.sflag [#allocation10], 1
    %21 = vsyncpa %s20, 0
    loop: start=0, step=1, limit=4
    $region2: #{tpu_custom_call.1} parent=1 // loop_pre_header
      _
    $region3: #{tpu_custom_call.1} parent=1 // loop_header
      %s23 = sphi 0, %s27
      %p24 = scmp.ge.s32.totalorder %s23, 4
      %s33 = sphi 0, %s35
      %s36 = sphi 0, %s33
      %s37 = sphi 0, %s36
      %s53 = sphi 0, %s37
      %s57 = sphi 0, %s57
      %s59 = sphi 0, %s57
      %s60 = sphi 0, %s59
      %s74 = sphi 0, %s60
      %s78 = sphi 0, %s78
      %s80 = sphi 0, %s78
      %s81 = sphi 0, %s80
      %s95 = sphi 0, %s81
      %s99 = sphi 0, %s99
      %s101 = sphi 0, %s99
      %s102 = sphi 0, %s101
      %s116 = sphi 0, %s102
      %s120 = sphi 0, %s120
      %s122 = sphi 0, %s120
      %s123 = sphi 0, %s122
      %s137 = sphi 0, %s123
      %s143 = sphi 0, %s145
      %s146 = sphi 0, %s143
      %s147 = sphi 0, %s146
      %s163 = sphi 0, %s147
      %s169 = sphi 0, %s171
      %s172 = sphi 0, %s169
      %s173 = sphi 0, %s172
      %s189 = sphi 0, %s173
    $region4: #{tpu_custom_call.1} parent=1 // loop_header_branch
      %26 = sbr.rel (%p24) target = $region8
    $region5: #{tpu_custom_call.1} parent=1 // loop_body
      %s28 = ssub.s32 %s23, 1
      %s29 = ssub.s32 %s23, 2
      %s30 = sadd.s32 %s23, 1
      %s31 = ssub.s32 %s23, %s30
      %p32 = scmp.eq.s32.totalorder %s31, 0
      %s34 = sadd.s32 %s33, 1
      %s35 = scalar_select %p32, %s33, %s34
      %p38 = pneg %p32
      %p39 = scmp.eq.s32.totalorder %s23, 1
      %p40 = por %p38, %p39
      %p41 = scmp.ne.s32.totalorder %s33, %s36
      %p42 = scmp.eq.s32.totalorder %s23, 0
      %p43 = por %p41, %p42
      %p44 = scmp.ne.s32.totalorder %s33, %s36
      %p45 = scmp.eq.s32.totalorder %s28, 1
      %p46 = por %p44, %p45
      %p47 = scmp.ne.s32.totalorder %s36, %s37
      %p48 = scmp.eq.s32.totalorder %s28, 0
      %p49 = por %p47, %p48
      %p50 = scmp.ne.s32.totalorder %s36, %s37
      %p51 = scmp.eq.s32.totalorder %s29, 1
      %p52 = por %p50, %p51
      %p54 = scmp.ne.s32.totalorder %s37, %s53
      %p55 = scmp.eq.s32.totalorder %s29, 0
      %p56 = por %p54, %p55
      %s58 = sadd.s32 %s57, 1
      %p61 = scmp.eq.s32.totalorder %s23, 1
      %p62 = scmp.ne.s32.totalorder %s57, %s59
      %p63 = scmp.eq.s32.totalorder %s23, 0
      %p64 = por %p62, %p63
      %p65 = scmp.ne.s32.totalorder %s57, %s59
      %p66 = scmp.eq.s32.totalorder %s28, 1
      %p67 = por %p65, %p66
      %p68 = scmp.ne.s32.totalorder %s59, %s60
      %p69 = scmp.eq.s32.totalorder %s28, 0
      %p70 = por %p68, %p69
      %p71 = scmp.ne.s32.totalorder %s59, %s60
      %p72 = scmp.eq.s32.totalorder %s29, 1
      %p73 = por %p71, %p72
      %p75 = scmp.ne.s32.totalorder %s60, %s74
      %p76 = scmp.eq.s32.totalorder %s29, 0
      %p77 = por %p75, %p76
      %s79 = sadd.s32 %s78, 1
      %p82 = scmp.eq.s32.totalorder %s23, 1
      %p83 = scmp.ne.s32.totalorder %s78, %s80
      %p84 = scmp.eq.s32.totalorder %s23, 0
      %p85 = por %p83, %p84
      %p86 = scmp.ne.s32.totalorder %s78, %s80
      %p87 = scmp.eq.s32.totalorder %s28, 1
      %p88 = por %p86, %p87
      %p89 = scmp.ne.s32.totalorder %s80, %s81
      %p90 = scmp.eq.s32.totalorder %s28, 0
      %p91 = por %p89, %p90
      %p92 = scmp.ne.s32.totalorder %s80, %s81
      %p93 = scmp.eq.s32.totalorder %s29, 1
      %p94 = por %p92, %p93
      %p96 = scmp.ne.s32.totalorder %s81, %s95
      %p97 = scmp.eq.s32.totalorder %s29, 0
      %p98 = por %p96, %p97
      %s100 = sadd.s32 %s99, 1
      %p103 = scmp.eq.s32.totalorder %s23, 1
      %p104 = scmp.ne.s32.totalorder %s99, %s101
      %p105 = scmp.eq.s32.totalorder %s23, 0
      %p106 = por %p104, %p105
      %p107 = scmp.ne.s32.totalorder %s99, %s101
      %p108 = scmp.eq.s32.totalorder %s28, 1
      %p109 = por %p107, %p108
      %p110 = scmp.ne.s32.totalorder %s101, %s102
      %p111 = scmp.eq.s32.totalorder %s28, 0
      %p112 = por %p110, %p111
      %p113 = scmp.ne.s32.totalorder %s101, %s102
      %p114 = scmp.eq.s32.totalorder %s29, 1
      %p115 = por %p113, %p114
      %p117 = scmp.ne.s32.totalorder %s102, %s116
      %p118 = scmp.eq.s32.totalorder %s29, 0
      %p119 = por %p117, %p118
      %s121 = sadd.s32 %s120, 1
      %p124 = scmp.eq.s32.totalorder %s23, 1
      %p125 = scmp.ne.s32.totalorder %s120, %s122
      %p126 = scmp.eq.s32.totalorder %s23, 0
      %p127 = por %p125, %p126
      %p128 = scmp.ne.s32.totalorder %s120, %s122
      %p129 = scmp.eq.s32.totalorder %s28, 1
      %p130 = por %p128, %p129
      %p131 = scmp.ne.s32.totalorder %s122, %s123
      %p132 = scmp.eq.s32.totalorder %s28, 0
      %p133 = por %p131, %p132
      %p134 = scmp.ne.s32.totalorder %s122, %s123
      %p135 = scmp.eq.s32.totalorder %s29, 1
      %p136 = por %p134, %p135
      %p138 = scmp.ne.s32.totalorder %s123, %s137
      %p139 = scmp.eq.s32.totalorder %s29, 0
      %p140 = por %p138, %p139
      %s141 = ssub.s32 %s23, %s30
      %p142 = scmp.eq.s32.totalorder %s141, 0
      %s144 = sadd.s32 %s143, 1
      %s145 = scalar_select %p142, %s143, %s144
      %p148 = pneg %p142
      %p149 = scmp.eq.s32.totalorder %s23, 1
      %p150 = por %p148, %p149
      %p151 = scmp.ne.s32.totalorder %s143, %s146
      %p152 = scmp.eq.s32.totalorder %s23, 0
      %p153 = por %p151, %p152
      %p154 = scmp.ne.s32.totalorder %s143, %s146
      %p155 = scmp.eq.s32.totalorder %s28, 1
      %p156 = por %p154, %p155
      %p157 = scmp.ne.s32.totalorder %s146, %s147
      %p158 = scmp.eq.s32.totalorder %s28, 0
      %p159 = por %p157, %p158
      %p160 = scmp.ne.s32.totalorder %s146, %s147
      %p161 = scmp.eq.s32.totalorder %s29, 1
      %p162 = por %p160, %p161
      %p164 = scmp.ne.s32.totalorder %s147, %s163
      %p165 = scmp.eq.s32.totalorder %s29, 0
      %p166 = por %p164, %p165
      %s167 = ssub.s32 %s23, %s30
      %p168 = scmp.eq.s32.totalorder %s167, 0
      %s170 = sadd.s32 %s169, 1
      %s171 = scalar_select %p168, %s169, %s170
      %p174 = pneg %p168
      %p175 = scmp.eq.s32.totalorder %s23, 1
      %p176 = por %p174, %p175
      %p177 = scmp.ne.s32.totalorder %s169, %s172
      %p178 = scmp.eq.s32.totalorder %s23, 0
      %p179 = por %p177, %p178
      %p180 = scmp.ne.s32.totalorder %s169, %s172
      %p181 = scmp.eq.s32.totalorder %s28, 1
      %p182 = por %p180, %p181
      %p183 = scmp.ne.s32.totalorder %s172, %s173
      %p184 = scmp.eq.s32.totalorder %s28, 0
      %p185 = por %p183, %p184
      %p186 = scmp.ne.s32.totalorder %s172, %s173
      %p187 = scmp.eq.s32.totalorder %s29, 1
      %p188 = por %p186, %p187
      %p190 = scmp.ne.s32.totalorder %s173, %s189
      %p191 = scmp.eq.s32.totalorder %s29, 0
      %p192 = por %p190, %p191
      %p193 = scmp.le.s32.totalorder 1, %s23
      %p194 = scmp.lt.s32.totalorder %s23, 3
      %p195 = pnand %p193, %p194
      %p196 = pneg %p195
      // Predicated region
      $region9: #{tpu_custom_call.1} parent=5 // pred_check
        _
      $region10: #{tpu_custom_call.1} parent=5 // pred_check_branch
        %198 = sbr.rel (%p195) target = $region12
      $region11: #{tpu_custom_call.1} parent=5 // pred_region
        %s199 = ssub.s32 %s23, 1
        // Predicated region
        $region13: #{tpu_custom_call.1} parent=11 // pred_check
          %p200 = pneg %p70
        $region14: #{tpu_custom_call.1} parent=11 // pred_check_branch
          %202 = sbr.rel (%p200) target = $region16
        $region15: #{tpu_custom_call.1} parent=11 // pred_region
          %s204 = ssub.s32 512, 512
          %205 = vsyncadd [#allocation6], %s204
          %s206 = sshll.u32 [#allocation5], 4
          %s207 = int_to_ptr.vmem [resolvable:$true] %s206
          %212 = dma.hbm_to_vmem [thread:$0]  %s1, 512, %s207, [#allocation6], 128, 128, 8
        $region16: #{tpu_custom_call.1} parent=11 // pred_fallthru
          _
        // Predicated region
        $region17: #{tpu_custom_call.1} parent=11 // pred_check
          %p213 = pneg %p91
        $region18: #{tpu_custom_call.1} parent=11 // pred_check_branch
          %215 = sbr.rel (%p213) target = $region20
        $region19: #{tpu_custom_call.1} parent=11 // pred_region
          %s217 = ssub.s32 512, 512
          %218 = vsyncadd [#allocation6], %s217
          %s219 = sshll.u32 [#allocation7], 4
          %s220 = int_to_ptr.vmem [resolvable:$true] %s219
          %225 = dma.hbm_to_vmem [thread:$0]  %s2, 512, %s220, [#allocation6], 128, 128, 8
        $region20: #{tpu_custom_call.1} parent=11 // pred_fallthru
          _
        // Predicated region
        $region21: #{tpu_custom_call.1} parent=11 // pred_check
          %p226 = pneg %p112
        $region22: #{tpu_custom_call.1} parent=11 // pred_check_branch
          %228 = sbr.rel (%p226) target = $region24
        $region23: #{tpu_custom_call.1} parent=11 // pred_region
          _
        $region24: #{tpu_custom_call.1} parent=11 // pred_fallthru
          _
        // Predicated region
        $region25: #{tpu_custom_call.1} parent=11 // pred_check
          %p229 = pneg %p133
        $region26: #{tpu_custom_call.1} parent=11 // pred_check_branch
          %231 = sbr.rel (%p229) target = $region28
        $region27: #{tpu_custom_call.1} parent=11 // pred_region
          _
        $region28: #{tpu_custom_call.1} parent=11 // pred_fallthru
          _
      $region12: #{tpu_custom_call.1} parent=5 // pred_fallthru
        _
      %p232 = scmp.lt.s32.totalorder %s23, 2
      // Predicated region
      $region29: #{tpu_custom_call.1} parent=5 // pred_check
        %p233 = pneg %p232
      $region30: #{tpu_custom_call.1} parent=5 // pred_check_branch
        %235 = sbr.rel (%p233) target = $region32
      $region31: #{tpu_custom_call.1} parent=5 // pred_region
        // Predicated region
        $region33: #{tpu_custom_call.1} parent=31 // pred_check
          %p236 = pneg %p43
        $region34: #{tpu_custom_call.1} parent=31 // pred_check_branch
          %238 = sbr.rel (%p236) target = $region36
        $region35: #{tpu_custom_call.1} parent=31 // pred_region
          %s239 = sand.u32 %s33, 1
          %s240 = scalar_lea.sflag [#allocation3], %s239
          %s241 = sand.u32 %s33, 1
          %s242 = smul.addr %s241, 16
          %s243 = scalar_lea.vmem [#allocation2], %s242
          %s245 = ssub.s32 256, 256
          %246 = vsyncadd %s240, %s245
          %s247 = smul.addr %s23, 2
          %s248 = smul.addr %s247, 128
          %s249 = scalar_lea.hbm %s0, %s248
          %s250 = sshll.u32 %s243, 4
          %s251 = int_to_ptr.vmem [resolvable:$true] %s250
          %256 = dma.hbm_to_vmem [thread:$0]  %s249, 256, %s251, %s240, 128, 128, 8
        $region36: #{tpu_custom_call.1} parent=31 // pred_fallthru
          _
      $region32: #{tpu_custom_call.1} parent=5 // pred_fallthru
        _
      %p257 = scmp.le.s32.totalorder 1, %s23
      %p258 = scmp.lt.s32.totalorder %s23, 3
      %p259 = pnand %p257, %p258
      %p260 = pneg %p259
      // Predicated region
      $region37: #{tpu_custom_call.1} parent=5 // pred_check
        _
      $region38: #{tpu_custom_call.1} parent=5 // pred_check_branch
        %262 = sbr.rel (%p259) target = $region40
      $region39: #{tpu_custom_call.1} parent=5 // pred_region
        %s263 = ssub.s32 %s23, 1
        %s264 = sand.u32 %s36, 1
        %s265 = scalar_lea.sflag [#allocation3], %s264
        %s266 = sand.u32 %s36, 1
        %s267 = smul.addr %s266, 16
        %s268 = scalar_lea.vmem [#allocation2], %s267
        // Predicated region
        $region41: #{tpu_custom_call.1} parent=39 // pred_check
          %p269 = pneg %p49
        $region42: #{tpu_custom_call.1} parent=39 // pred_check_branch
          %271 = sbr.rel (%p269) target = $region44
        $region43: #{tpu_custom_call.1} parent=39 // pred_region
          %272 = dma.done %s265, 256
        $region44: #{tpu_custom_call.1} parent=39 // pred_fallthru
          _
        // Predicated region
        $region45: #{tpu_custom_call.1} parent=39 // pred_check
          %p273 = pneg %p70
        $region46: #{tpu_custom_call.1} parent=39 // pred_check_branch
          %275 = sbr.rel (%p273) target = $region48
        $region47: #{tpu_custom_call.1} parent=39 // pred_region
          %276 = dma.done [#allocation6], 512
        $region48: #{tpu_custom_call.1} parent=39 // pred_fallthru
          _
        // Predicated region
        $region49: #{tpu_custom_call.1} parent=39 // pred_check
          %p277 = pneg %p91
        $region50: #{tpu_custom_call.1} parent=39 // pred_check_branch
          %279 = sbr.rel (%p277) target = $region52
        $region51: #{tpu_custom_call.1} parent=39 // pred_region
          %280 = dma.done [#allocation6], 512
        $region52: #{tpu_custom_call.1} parent=39 // pred_fallthru
          _
        %s281 = sand.u32 %s36, 1
        %s282 = scalar_lea.sflag [#allocation3], %s281
        %s283 = sand.u32 %s36, 1
        %s284 = smul.addr %s283, 16
        %s285 = scalar_lea.vmem [#allocation2], %s284
        %p286 = pneg %p49
        %p287 = pneg %p46
        %p288 = pneg %p70
        %p289 = pneg %p67
        %p290 = pneg %p91
        %p291 = pneg %p88
        %p292 = pneg %p112
        %p293 = pneg %p109
        %p294 = pneg %p133
        %p295 = pneg %p130
        %p296 = pneg %p159
        %p297 = pneg %p156
        %s298 = sand.u32 %s146, 1
        %s299 = scalar_lea.sflag [#allocation4], %s298
        %s300 = sand.u32 %s146, 1
        %s301 = smul.addr %s300, 16
        %s302 = scalar_lea.vmem [#allocation8], %s301
        %p303 = pneg %p185
        %p304 = pneg %p182
        %s305 = sand.u32 %s172, 1
        %s306 = scalar_lea.sflag [#allocation10], %s305
        %s307 = sand.u32 %s172, 1
        %s308 = smul.addr %s307, 16
        %s309 = scalar_lea.vmem [#allocation9], %s308
        %v310 = vld [vmem:[%s268] sm:$0xff]
        %v311 = vld [vmem:[%s268 + $0x8] sm:$0xff]
        %v312 = vld [vmem:[#allocation5] sm:$0xff]
        %v313 = vld [vmem:[#allocation5 + $0x8] sm:$0xff]
        %v314 = vld [vmem:[#allocation5 + $0x10] sm:$0xff]
        %v315 = vld [vmem:[#allocation5 + $0x18] sm:$0xff]
        %v316 = vld [vmem:[%s3] sm:$0x1]
        %v318 = vlaneseq
        %v319 = vshrl.u32 %v318, 7
        %v320 = vsub.s32 0, %v319
        %v321 = vrot.slane %v316, %v320
        %vm323 = vcmask 261120
        %v325 = vsel %vm323, %v310, 0
        %v328 = vsel %vm323, %v311, 0
        %330 = vmatprep.subr.mxu0 0.0
        %331 = vmatpush1.msra.mxu0 0.0
        %332 = vmatprep.subr.mxu0 0.0
        %333 = vmatpush1.msra.mxu0 0.0
        %334 = vmatprep.subr.mxu0 0.0
        %335 = vmatpush1.msra.mxu0 0.0
        %336 = vmatprep.subr.mxu0 0.0
        %337 = vmatpush1.msra.mxu0 0.0
        %338 = vmatprep.subr.mxu0 0.0
        %339 = vmatpush1.msra.mxu0 0.0
        %340 = vmatprep.subr.mxu0 0.0
        %341 = vmatpush1.msra.mxu0 0.0
        %342 = vmatprep.subr.mxu0 0.0
        %343 = vmatpush1.msra.mxu0 0.0
        %344 = vmatprep.subr.mxu0 0.0
        %345 = vmatpush1.msra.mxu0 0.0
        %346 = vmatprep.subr.mxu0 0.0
        %347 = vmatpush1.msra.mxu0 0.0
        %348 = vmatprep.subr.mxu0 0.0
        %349 = vmatpush1.msra.mxu0 0.0
        %350 = vmatprep.subr.mxu0 0.0
        %351 = vmatpush1.msra.mxu0 0.0
        %352 = vmatprep.subr.mxu0 0.0
        %353 = vmatpush1.msra.mxu0 0.0
        %354 = vmatprep.subr.mxu0 0.0
        %355 = vmatpush1.msra.mxu0 %v315
        %356 = vmatprep.subr.mxu0 0.0
        %357 = vmatpush1.msra.mxu0 %v314
        %358 = vmatprep.subr.mxu0 0.0
        %359 = vmatpush1.msra.mxu0 %v313
        %360 = vmatprep.subr.mxu0 0.0
        %361 = vmatpush1.msra.mxu0 %v312
        %362 = vmatprep.subr.mxu0 0.0
        %363 = vmatpush2.msra.mxu0 0.0
        %364 = vmatprep.subr.mxu0 0.0
        %365 = vmatpush2.msra.mxu0 0.0
        %366 = vmatprep.subr.mxu0 0.0
        %367 = vmatpush2.msra.mxu0 0.0
        %368 = vmatprep.subr.mxu0 0.0
        %369 = vmatpush2.msra.mxu0 0.0
        %370 = vmatprep.subr.mxu0 0.0
        %371 = vmatpush2.msra.mxu0 0.0
        %372 = vmatprep.subr.mxu0 0.0
        %373 = vmatpush2.msra.mxu0 0.0
        %374 = vmatprep.subr.mxu0 0.0
        %375 = vmatpush2.msra.mxu0 0.0
        %376 = vmatprep.subr.mxu0 0.0
        %377 = vmatpush2.msra.mxu0 0.0
        %378 = vmatprep.subr.mxu0 0.0
        %379 = vmatpush2.msra.mxu0 0.0
        %380 = vmatprep.subr.mxu0 0.0
        %381 = vmatpush2.msra.mxu0 0.0
        %382 = vmatprep.subr.mxu0 0.0
        %383 = vmatpush2.msra.mxu0 0.0
        %384 = vmatprep.subr.mxu0 0.0
        %385 = vmatpush2.msra.mxu0 0.0
        %386 = vmatprep.subr.mxu0 0.0
        %387 = vmatpush2.msra.mxu0 0.0
        %388 = vmatprep.subr.mxu0 0.0
        %389 = vmatpush2.msra.mxu0 0.0
        %390 = vmatprep.subr.mxu0 0.0
        %391 = vmatpush2.msra.mxu0 0.0
        %392 = vmatprep.subr.mxu0 0.0
        %393 = vmatpush2.msra.mxu0 0.0
        %394 = vmatprep.mubr.f32.mxu0 0.0
        %395 = vmatmul.mubr.f32.gmra.mxu0 %v325
        %v396 = vpop.f32.mrf.mxu0
        %v397 = vadd.f32 %v321, %v396
        %v398 = vpop.f32.mrf.mxu0
        %399 = vmatprep.mubr.f32.mxu0 0.0
        %400 = vmatmul.mubr.f32.gmra.mxu0 %v328
        %v401 = vpop.f32.mrf.mxu0
        %v402 = vadd.f32 %v321, %v401
        %v403 = vpop.f32.mrf.mxu0
        %404 = vdwg.mxu0
        %405 = vst [vmem:[%s302] sm:$0xff] %v397
        %406 = vst [vmem:[%s302 + $0x8] sm:$0xff] %v402
        %v407 = vld [vmem:[#allocation7] sm:$0xff]
        %v408 = vld [vmem:[#allocation7 + $0x8] sm:$0xff]
        %v409 = vld [vmem:[#allocation7 + $0x10] sm:$0xff]
        %v410 = vld [vmem:[#allocation7 + $0x18] sm:$0xff]
        %v411 = vld [vmem:[%s4] sm:$0x1]
        %v413 = vlaneseq
        %v414 = vshrl.u32 %v413, 7
        %v415 = vsub.s32 0, %v414
        %v416 = vrot.slane %v411, %v415
        %418 = vmatprep.subr.mxu0 0.0
        %419 = vmatpush1.msra.mxu0 0.0
        %420 = vmatprep.subr.mxu0 0.0
        %421 = vmatpush1.msra.mxu0 0.0
        %422 = vmatprep.subr.mxu0 0.0
        %423 = vmatpush1.msra.mxu0 0.0
        %424 = vmatprep.subr.mxu0 0.0
        %425 = vmatpush1.msra.mxu0 0.0
        %426 = vmatprep.subr.mxu0 0.0
        %427 = vmatpush1.msra.mxu0 0.0
        %428 = vmatprep.subr.mxu0 0.0
        %429 = vmatpush1.msra.mxu0 0.0
        %430 = vmatprep.subr.mxu0 0.0
        %431 = vmatpush1.msra.mxu0 0.0
        %432 = vmatprep.subr.mxu0 0.0
        %433 = vmatpush1.msra.mxu0 0.0
        %434 = vmatprep.subr.mxu0 0.0
        %435 = vmatpush1.msra.mxu0 0.0
        %436 = vmatprep.subr.mxu0 0.0
        %437 = vmatpush1.msra.mxu0 0.0
        %438 = vmatprep.subr.mxu0 0.0
        %439 = vmatpush1.msra.mxu0 0.0
        %440 = vmatprep.subr.mxu0 0.0
        %441 = vmatpush1.msra.mxu0 0.0
        %442 = vmatprep.subr.mxu0 0.0
        %443 = vmatpush1.msra.mxu0 %v410
        %444 = vmatprep.subr.mxu0 0.0
        %445 = vmatpush1.msra.mxu0 %v409
        %446 = vmatprep.subr.mxu0 0.0
        %447 = vmatpush1.msra.mxu0 %v408
        %448 = vmatprep.subr.mxu0 0.0
        %449 = vmatpush1.msra.mxu0 %v407
        %450 = vmatprep.subr.mxu0 0.0
        %451 = vmatpush2.msra.mxu0 0.0
        %452 = vmatprep.subr.mxu0 0.0
        %453 = vmatpush2.msra.mxu0 0.0
        %454 = vmatprep.subr.mxu0 0.0
        %455 = vmatpush2.msra.mxu0 0.0
        %456 = vmatprep.subr.mxu0 0.0
        %457 = vmatpush2.msra.mxu0 0.0
        %458 = vmatprep.subr.mxu0 0.0
        %459 = vmatpush2.msra.mxu0 0.0
        %460 = vmatprep.subr.mxu0 0.0
        %461 = vmatpush2.msra.mxu0 0.0
        %462 = vmatprep.subr.mxu0 0.0
        %463 = vmatpush2.msra.mxu0 0.0
        %464 = vmatprep.subr.mxu0 0.0
        %465 = vmatpush2.msra.mxu0 0.0
        %466 = vmatprep.subr.mxu0 0.0
        %467 = vmatpush2.msra.mxu0 0.0
        %468 = vmatprep.subr.mxu0 0.0
        %469 = vmatpush2.msra.mxu0 0.0
        %470 = vmatprep.subr.mxu0 0.0
        %471 = vmatpush2.msra.mxu0 0.0
        %472 = vmatprep.subr.mxu0 0.0
        %473 = vmatpush2.msra.mxu0 0.0
        %474 = vmatprep.subr.mxu0 0.0
        %475 = vmatpush2.msra.mxu0 0.0
        %476 = vmatprep.subr.mxu0 0.0
        %477 = vmatpush2.msra.mxu0 0.0
        %478 = vmatprep.subr.mxu0 0.0
        %479 = vmatpush2.msra.mxu0 0.0
        %480 = vmatprep.subr.mxu0 0.0
        %481 = vmatpush2.msra.mxu0 0.0
        %482 = vmatprep.mubr.f32.mxu0 0.0
        %483 = vmatmul.mubr.f32.gmra.mxu0 %v325
        %v484 = vpop.f32.mrf.mxu0
        %v485 = vadd.f32 %v416, %v484
        %v486 = vpop.f32.mrf.mxu0
        %487 = vmatprep.mubr.f32.mxu0 0.0
        %488 = vmatmul.mubr.f32.gmra.mxu0 %v328
        %v489 = vpop.f32.mrf.mxu0
        %v490 = vadd.f32 %v416, %v489
        %v491 = vpop.f32.mrf.mxu0
        %492 = vdwg.mxu0
        %493 = vst [vmem:[%s309] sm:$0xff] %v485
        %494 = vst [vmem:[%s309 + $0x8] sm:$0xff] %v490
        %s495 = sand.u32 %s146, 1
        %s496 = scalar_lea.sflag [#allocation4], %s495
        %s497 = sand.u32 %s146, 1
        %s498 = smul.addr %s497, 16
        %s499 = scalar_lea.vmem [#allocation8], %s498
        %s500 = sand.u32 %s172, 1
        %s501 = scalar_lea.sflag [#allocation10], %s500
        %s502 = sand.u32 %s172, 1
        %s503 = smul.addr %s502, 16
        %s504 = scalar_lea.vmem [#allocation9], %s503
        // Predicated region
        $region53: #{tpu_custom_call.1} parent=39 // pred_check
          %p505 = pneg %p156
        $region54: #{tpu_custom_call.1} parent=39 // pred_check_branch
          %507 = sbr.rel (%p505) target = $region56
        $region55: #{tpu_custom_call.1} parent=39 // pred_region
          %s509 = ssub.s32 256, 256
          %510 = vsyncadd %s496, %s509
          %s511 = smul.addr %s28, 2
          %s512 = smul.addr %s511, 128
          %s513 = scalar_lea.hbm %s5, %s512
          %s514 = sshll.u32 %s499, 4
          %s515 = int_to_ptr.vmem [resolvable:$true] %s514
          %520 = dma.vmem_to_hbm [thread:$0]  %s515, 256, %s513, %s496, 128, 128, 8
        $region56: #{tpu_custom_call.1} parent=39 // pred_fallthru
          _
        // Predicated region
        $region57: #{tpu_custom_call.1} parent=39 // pred_check
          %p521 = pneg %p182
        $region58: #{tpu_custom_call.1} parent=39 // pred_check_branch
          %523 = sbr.rel (%p521) target = $region60
        $region59: #{tpu_custom_call.1} parent=39 // pred_region
          %s525 = ssub.s32 256, 256
          %526 = vsyncadd %s501, %s525
          %s527 = smul.addr %s28, 2
          %s528 = smul.addr %s527, 128
          %s529 = scalar_lea.hbm %s6, %s528
          %s530 = sshll.u32 %s504, 4
          %s531 = int_to_ptr.vmem [resolvable:$true] %s530
          %536 = dma.vmem_to_hbm [thread:$0]  %s531, 256, %s529, %s501, 128, 128, 8
        $region60: #{tpu_custom_call.1} parent=39 // pred_fallthru
          _
      $region40: #{tpu_custom_call.1} parent=5 // pred_fallthru
        _
      %p537 = scmp.le.s32.totalorder 2, %s23
      // Predicated region
      $region61: #{tpu_custom_call.1} parent=5 // pred_check
        %p538 = pneg %p537
      $region62: #{tpu_custom_call.1} parent=5 // pred_check_branch
        %540 = sbr.rel (%p538) target = $region64
      $region63: #{tpu_custom_call.1} parent=5 // pred_region
        %s541 = ssub.s32 %s23, 2
        // Predicated region
        $region65: #{tpu_custom_call.1} parent=63 // pred_check
          %p542 = pneg %p162
        $region66: #{tpu_custom_call.1} parent=63 // pred_check_branch
          %544 = sbr.rel (%p542) target = $region68
        $region67: #{tpu_custom_call.1} parent=63 // pred_region
          %s545 = sand.u32 %s147, 1
          %s546 = scalar_lea.sflag [#allocation4], %s545
          %s547 = sand.u32 %s147, 1
          %s548 = smul.addr %s547, 16
          %s549 = scalar_lea.vmem [#allocation8], %s548
          %550 = dma.done %s546, 256
        $region68: #{tpu_custom_call.1} parent=63 // pred_fallthru
          _
        // Predicated region
        $region69: #{tpu_custom_call.1} parent=63 // pred_check
          %p551 = pneg %p188
        $region70: #{tpu_custom_call.1} parent=63 // pred_check_branch
          %553 = sbr.rel (%p551) target = $region72
        $region71: #{tpu_custom_call.1} parent=63 // pred_region
          %s554 = sand.u32 %s173, 1
          %s555 = scalar_lea.sflag [#allocation10], %s554
          %s556 = sand.u32 %s173, 1
          %s557 = smul.addr %s556, 16
          %s558 = scalar_lea.vmem [#allocation9], %s557
          %559 = dma.done %s555, 256
        $region72: #{tpu_custom_call.1} parent=63 // pred_fallthru
          _
      $region64: #{tpu_custom_call.1} parent=5 // pred_fallthru
        _
    $region6: #{tpu_custom_call.1} parent=1 // loop_footer
      %s27 = sadd.s32 1, %s23
    $region7: #{tpu_custom_call.1} parent=1 // loop_footer_branch
      %22 = sbr.rel target = $region3
    $region8: #{tpu_custom_call.1} parent=1 // loop_exit
      _
    %560 = vsyncpa [#allocation3], 1
    %s561 = scalar_lea.sflag [#allocation3], 1
    %562 = vsyncpa %s561, 1
    %563 = vsyncpa [#allocation6], 1
    %564 = vsyncpa [#allocation4], 1
    %s565 = scalar_lea.sflag [#allocation4], 1
    %566 = vsyncpa %s565, 1
    %567 = vsyncpa [#allocation10], 1
    %s568 = scalar_lea.sflag [#allocation10], 1
    %569 = vsyncpa %s568, 1

</llo_original>
